<compile_context>
chip_gen: v6e
topology: v6e:2x2x1
jax: 0.10.0
libtpu: 0.0.40
codegen_flags: <defaults>
</compile_context>

<pallas_src>
import functools

import jax
import jax.numpy as jnp
from jax.experimental import pallas as pl
from jax.experimental.pallas import tpu as pltpu


def _scale_norm_kernel(g_ref, x_ref, o_ref, *, eps):
    # g_ref: (1,) scalar gain in SMEM; x_ref/o_ref: (block_rows, dim) VMEM tiles.
    x = x_ref[...]
    xf = x.astype(jnp.float32)                        # f32 statistics
    sq = jnp.sum(xf * xf, axis=-1, keepdims=True)     # (block_rows, 1)
    # 1 / max(sqrt(sq), eps) == min(rsqrt(sq), 1/eps) -- EUP rsqrt, no divide.
    inv = jnp.minimum(jax.lax.rsqrt(sq), jnp.float32(1.0 / eps))
    scale = g_ref[0].astype(jnp.float32) * inv        # fold gain into per-row scale
    # Single broadcast multiply in the input dtype (halves VALU/vreg work for bf16).
    o_ref[...] = (x * scale.astype(x.dtype)).astype(o_ref.dtype)


def _pick_block_rows(rows, dim, dtype, vmem_tile_budget=24 * 1024 * 1024):
    """Largest multiple-of-8 row tile whose double-buffered in+out tiles
    (plus f32-wide working temporaries) fit a conservative cross-generation
    VMEM budget (safe on v7x's 64 MiB physical / 32 MiB scoped VMEM too)."""
    itemsize = jnp.dtype(dtype).itemsize
    # 2 buffers x (in + out) tiles + ~2 f32-wide temporaries per element.
    bytes_per_row = dim * (4 * itemsize + 8)
    br = max(8, vmem_tile_budget // bytes_per_row)
    br = min(br, 2048)                                # diminishing returns past this
    br = min(br, ((rows + 7) // 8) * 8)               # never exceed (8-rounded) rows
    br = max(8, (br // 8) * 8)                        # sublane alignment
    return int(br)


def scale_norm(x, g, eps=1e-5, *, block_rows=None,
               vmem_limit_bytes=32 * 1024 * 1024):
    """x: any shape (..., dim); g: shape (1,) learnable scalar gain."""
    orig_shape = x.shape
    dim = orig_shape[-1]
    x2 = x.reshape(-1, dim)                           # metadata-only reshape
    rows = x2.shape[0]

    if block_rows is None:
        block_rows = _pick_block_rows(rows, dim, x.dtype)

    # Ragged last block is handled by Pallas (masked boundary writes) -> no
    # jnp.pad / output-slice HBM round-trips.
    grid = (pl.cdiv(rows, block_rows),)

    # TODO(synk): for extremely large dim (>~64K f32) a 2-D (rows, dim-chunk)
    # grid with a cross-step accumulator would be needed; the untiled dim is
    # kept here so the norm reduction stays inside one block.
    out = pl.pallas_call(
        functools.partial(_scale_norm_kernel, eps=eps),
        out_shape=jax.ShapeDtypeStruct((rows, dim), x.dtype),
        grid_spec=pltpu.PrefetchScalarGridSpec(
            num_scalar_prefetch=0,
            grid=grid,
            in_specs=[
                pl.BlockSpec(memory_space=pltpu.MemorySpace.SMEM),   # g (scalar)
                pl.BlockSpec((block_rows, dim), lambda i: (i, 0)),   # x tile
            ],
            out_specs=pl.BlockSpec((block_rows, dim), lambda i: (i, 0)),
        ),
        compiler_params=pltpu.CompilerParams(
            # Row axis is independent -> v7x's two TensorCores shard it.
            dimension_semantics=("parallel",),
            vmem_limit_bytes=vmem_limit_bytes,
        ),
    )(g, x2)

    return out.reshape(orig_shape)


def scale_norm_ref(x, g, eps=1e-5):
    # Faithful to torch: n = norm(x, dim=-1, keepdim=True).clamp(min=eps); x/n*g
    n = jnp.sqrt(jnp.sum(x.astype(jnp.float32) ** 2, axis=-1, keepdims=True))
    n = jnp.maximum(n, eps)
    return (x.astype(jnp.float32) / n * g[0]).astype(x.dtype)


if __name__ == "__main__":
    key = jax.random.PRNGKey(0)

    # Parameter init per module __init__: g = ones(1)
    g = jnp.ones((1,), dtype=jnp.float32)

    # Primary small test (batch=2, seq=8, hidden=32).
    batch, seq, hidden = 2, 8, 32
    x = jax.random.normal(key, (batch, seq, hidden), dtype=jnp.float32)
    y = jax.block_until_ready(scale_norm(x, g, eps=1e-5))
    y_ref = scale_norm_ref(x, g, eps=1e-5)
    assert y.shape == x.shape
    assert jnp.allclose(y, y_ref, atol=1e-5, rtol=1e-5), "mismatch vs reference"

    # Ragged-rows test (rows=15 not a multiple of 8) exercises the no-pad path.
    x2 = jax.random.normal(jax.random.PRNGKey(1), (3, 5, hidden), dtype=jnp.float32)
    y2 = jax.block_until_ready(scale_norm(x2, g, eps=1e-5))
    y2_ref = scale_norm_ref(x2, g, eps=1e-5)
    assert y2.shape == x2.shape
    assert jnp.allclose(y2, y2_ref, atol=1e-5, rtol=1e-5), "ragged mismatch vs reference"

    print("KERNEL_OK")
</pallas_src>

<mosaic_0001>
module attributes {stable_mosaic.version = 11 : i64} {
  func.func @_scale_norm_kernel(%arg0: i32, %arg1: memref<1xf32, #tpu.memory_space<smem>>, %arg2: memref<16x32xf32, #tpu.memory_space<vmem>>, %arg3: memref<16x32xf32, #tpu.memory_space<vmem>>) attributes {dimension_semantics = [#tpu.dimension_semantics<parallel>], iteration_bounds = array<i64: 1>, scalar_prefetch = 0 : i64, scratch_operands = 0 : i64, tpu.core_type = #tpu.core_type<tc>, window_params = [{transform_indices = @transform_0, window_bounds = array<i64: 1>}, {transform_indices = @transform_1, window_bounds = array<i64: 16, 32>}, {transform_indices = @transform_2, window_bounds = array<i64: 16, 32>}]} {
    %c0 = arith.constant 0 : index
    %c0_0 = arith.constant 0 : index
    %0 = vector.load %arg2[%c0, %c0_0] : memref<16x32xf32, #tpu.memory_space<vmem>>, vector<16x32xf32>
    %1 = arith.mulf %0, %0 : vector<16x32xf32>
    %cst = arith.constant dense<0.000000e+00> : vector<16xf32>
    %2 = vector.multi_reduction <add>, %1, %cst [1] : vector<16x32xf32> to vector<16xf32>
    %3 = vector.shape_cast %2 : vector<16xf32> to vector<16x1xf32>
    %4 = math.rsqrt %3 : vector<16x1xf32>
    %cst_1 = arith.constant 1.000000e+05 : f32
    %5 = vector.broadcast %cst_1 : f32 to vector<16x1xf32>
    %6 = arith.minimumf %4, %5 : vector<16x1xf32>
    %c0_2 = arith.constant 0 : index
    %7 = memref.load %arg1[%c0_2] : memref<1xf32, #tpu.memory_space<smem>>
    %8 = vector.broadcast %7 : f32 to vector<16x1xf32>
    %9 = arith.mulf %8, %6 : vector<16x1xf32>
    %10 = vector.broadcast %9 : vector<16x1xf32> to vector<16x32xf32>
    %11 = arith.mulf %0, %10 : vector<16x32xf32>
    %c0_3 = arith.constant 0 : index
    %c0_4 = arith.constant 0 : index
    %12 = vector.load %arg3[%c0_3, %c0_4] : memref<16x32xf32, #tpu.memory_space<vmem>>, vector<16x32xf32>
    tpu.vector_store %arg3[%c0_3, %c0_4], %11 {strides = array<i32>} : memref<16x32xf32, #tpu.memory_space<vmem>>, vector<16x32xf32>,
    return
  }
  func.func @transform_0(%arg0: i32) -> i32 {
    %c0_i32 = arith.constant 0 : i32
    %c0_i32_0 = arith.constant 0 : i32
    return %c0_i32 : i32
  }
  func.func @transform_1(%arg0: i32) -> (i32, i32) {
    %c0_i32 = arith.constant 0 : i32
    %c0_i32_0 = arith.constant 0 : i32
    return %arg0, %c0_i32 : i32, i32
  }
  func.func @transform_2(%arg0: i32) -> (i32, i32) {
    %c0_i32 = arith.constant 0 : i32
    %c0_i32_0 = arith.constant 0 : i32
    return %arg0, %c0_i32 : i32, i32
  }
}

</mosaic_0001>

<llo_original>
// kernel: tpu_custom_call.1
$region0: #{tpu_custom_call.1}
  #allocation0 [shape = 'u32[]', space=smem, size = 0x4, offset = 0x4, fixed_abs, tag = 'smem constant byte address 0x4 - core index']
  #allocation1 [shape = 'u32[144,128]{1,0:T(1,128)}', space=vmem, size = 0x12000, scoped, tag = 'internal scratch']
  #allocation2 [shape = 'f32[1]{0:T(128)S(6)}', space=smem, size = 0x200, scoped, tag = 'scoped memory for tpu_custom_call.1']
  %s0 = inlined_call_operand.<no memory space> [shape: f32[1], index: 0, kind: input, shape index: {}]
  %s1 = inlined_call_operand.hbm [shape: f32[16,32], index: 1, kind: input, shape index: {}]
  %s2 = inlined_call_operand.hbm [shape: f32[16,32], index: 2, kind: output, shape index: {}]
  %s3 = sld [smem:[#allocation0]]
  $region22: #{tpu_custom_call.1} parent=0
    _
  %s5 = ssub.s32 1, %s3
  %s6 = scalar_select 0, %s5, %s3
  %7 = sst [smem:[#allocation2]] %s0
  $region1: #{tpu_custom_call.1} parent=0
    #allocation3 [shape = 'u8[8192]{0}', space=vmem, size = 0x2000, scoped, tag = 'input window, operand 1, single buffered']
    #allocation4 [shape = 's32[1]{0}', space=sflag, size = 0x4, scoped, tag = 'scoped memory for tpu_custom_call.1']
    #allocation5 [shape = 's32[1]{0}', space=sflag, size = 0x4, scoped, tag = 'scoped memory for tpu_custom_call.1']
    #allocation6 [shape = 'u8[8192]{0}', space=vmem, size = 0x2000, scoped, tag = 'output window, operand 0, single buffered']
    %8 = vsyncpa [#allocation4], 0
    %9 = vsyncpa [#allocation5], 0
    // Predicated region
    $region2: #{tpu_custom_call.1} parent=1 // pred_check
      _
    $region3: #{tpu_custom_call.1} parent=1 // pred_check_branch
      %11 = sbr.rel (0) target = $region5
    $region4: #{tpu_custom_call.1} parent=1 // pred_region
      _
    $region5: #{tpu_custom_call.1} parent=1 // pred_fallthru
      _
    // Predicated region
    $region6: #{tpu_custom_call.1} parent=1 // pred_check
      _
    $region7: #{tpu_custom_call.1} parent=1 // pred_check_branch
      %13 = sbr.rel (0) target = $region9
    $region8: #{tpu_custom_call.1} parent=1 // pred_region
      %s15 = ssub.s32 256, 256
      %16 = vsyncadd [#allocation4], %s15
      %s17 = sshll.u32 [#allocation3], 4
      %s18 = int_to_ptr.vmem [resolvable:$true] %s17
      %23 = dma.hbm_to_vmem [thread:$0]  %s1, 256, %s18, [#allocation4], 128, 128, 8
    $region9: #{tpu_custom_call.1} parent=1 // pred_fallthru
      _
    // Predicated region
    $region10: #{tpu_custom_call.1} parent=1 // pred_check
      _
    $region11: #{tpu_custom_call.1} parent=1 // pred_check_branch
      %25 = sbr.rel (0) target = $region13
    $region12: #{tpu_custom_call.1} parent=1 // pred_region
      %26 = dma.done [#allocation4], 256
    $region13: #{tpu_custom_call.1} parent=1 // pred_fallthru
      _
    %v27 = vld [vmem:[#allocation3] sm:$0xff]
    %v28 = vld [vmem:[#allocation3 + $0x8] sm:$0xff]
    %v29 = vmul.f32 %v27, %v27
    %v30 = vmul.f32 %v28, %v28
    %vm31 = vcmask 261120
    %v32 = vsel %vm31, %v29, 0.0
    %33 = vadd.xlane.f32.xlu0 %v32
    %v34 = vpop.xlane.xlu0 %33
    %v35 = vsel %vm31, %v30, 0.0
    %36 = vadd.xlane.f32.xlu0 %v35
    %v37 = vpop.xlane.xlu0 %36
    %v38 = vrsqrt.pop %v34
    %v39 = vrsqrt.pop %v37
    %v40 = vmin.f32 %v38, 100000.0
    %v41 = vmin.f32 %v39, 100000.0
    %s42 = sld [smem:[#allocation2]]
    %v43 = vstv %s42
    %v44 = vmul.f32 %v43, %v40
    %v45 = vmul.f32 %v43, %v41
    %v46 = vmul.f32 %v27, %v44
    %v47 = vmul.f32 %v28, %v45
    %48 = vst.msk [vmem:[#allocation6] sm:$0xff] %vm31, %v46
    %49 = vst.msk [vmem:[#allocation6 + $0x8] sm:$0xff] %vm31, %v47
    // Predicated region
    $region14: #{tpu_custom_call.1} parent=1 // pred_check
      _
    $region15: #{tpu_custom_call.1} parent=1 // pred_check_branch
      %51 = sbr.rel (0) target = $region17
    $region16: #{tpu_custom_call.1} parent=1 // pred_region
      %s53 = ssub.s32 256, 256
      %54 = vsyncadd [#allocation5], %s53
      %s55 = sshll.u32 [#allocation6], 4
      %s56 = int_to_ptr.vmem [resolvable:$true] %s55
      %61 = dma.vmem_to_hbm [thread:$0]  %s56, 256, %s2, [#allocation5], 128, 128, 8
    $region17: #{tpu_custom_call.1} parent=1 // pred_fallthru
      _
    // Predicated region
    $region18: #{tpu_custom_call.1} parent=1 // pred_check
      _
    $region19: #{tpu_custom_call.1} parent=1 // pred_check_branch
      %63 = sbr.rel (0) target = $region21
    $region20: #{tpu_custom_call.1} parent=1 // pred_region
      %64 = dma.done [#allocation5], 256
    $region21: #{tpu_custom_call.1} parent=1 // pred_fallthru
      _
    %65 = vsyncpa [#allocation4], 1
    %66 = vsyncpa [#allocation5], 1

</llo_original>
